<compile_context>
chip_gen: v7x
topology: tpu7x:2x2x1
jax: 0.10.0
libtpu: 0.0.40
codegen_flags: <defaults>
</compile_context>

<pallas_src>
import jax
import jax.numpy as jnp
from jax.experimental import pallas as pl
from jax.experimental.pallas import tpu as pltpu

LANE = 128  # TPU lane width; output-layer columns are padded to this


def readout_kernel(feat_ref, emb_ref, w1a_ref, w1b_ref, b1_ref,
                   w2_ref, b2_ref, w3_ref, b3_ref, o_ref):
    # One graph per grid step.  Blocks: feat [1,N,A], emb [1,N,E], out [1,1,Cp].
    feat = feat_ref[0].astype(jnp.bfloat16)                            # [N, A]
    emb = emb_ref[0].astype(jnp.bfloat16)                              # [N, E]

    # layer 1 -- fused concat:  x @ w1 == feat @ w1[:A] + emb @ w1[A:]
    h = (jnp.dot(feat, w1a_ref[...], preferred_element_type=jnp.float32)
         + jnp.dot(emb, w1b_ref[...], preferred_element_type=jnp.float32)
         + b1_ref[...])
    h = jnp.maximum(h, 0.0)                                            # f32 [N, H]

    # layer 2
    g = jnp.dot(h.astype(jnp.bfloat16), w2_ref[...],
                preferred_element_type=jnp.float32) + b2_ref[...]
    g = jnp.maximum(g, 0.0)                                            # f32 [N, O]

    # mean over nodes hoisted before the (linear) output layer
    g_mean = jnp.mean(g, axis=0, keepdims=True)                        # f32 [1, O]

    # layer 3 (output layer), lane-padded to LANE columns -> full-lane store
    logits = jnp.dot(g_mean.astype(jnp.bfloat16), w3_ref[...],
                     preferred_element_type=jnp.float32) + b3_ref[...]
    o_ref[0] = logits                                                  # [1, Cp]


def prepare_params(params, attr_dim):
    """One-time preprocessing of the f32 [in, out] Linear params for the kernel:
    split w1 at attr_dim (fused concat), cast matmul weights to bf16, and
    zero-pad the output layer to LANE columns for a lane-dense final store."""
    w1, b1, w2, b2, w3, b3 = params
    out_dim, num_cats = w3.shape
    c_pad = max(LANE, ((num_cats + LANE - 1) // LANE) * LANE)
    w1a = w1[:attr_dim, :].astype(jnp.bfloat16)
    w1b = w1[attr_dim:, :].astype(jnp.bfloat16)
    w2b = w2.astype(jnp.bfloat16)
    w3p = jnp.zeros((out_dim, c_pad), jnp.bfloat16).at[:, :num_cats].set(
        w3.astype(jnp.bfloat16))
    b3p = jnp.zeros((1, c_pad), jnp.float32).at[:, :num_cats].set(b3)
    return (w1a, w1b, b1.astype(jnp.float32), w2b, b2.astype(jnp.float32),
            w3p, b3p)


def readout_forward_batched(node_features, node_embeddings, kernel_params,
                            num_cats):
    """node_features: [G, N, attr_dim] f32, node_embeddings: [G, N, emb_dim] f32.
    Returns [G, num_cats] logits (one graph-level readout per graph)."""
    w1a, w1b, b1, w2, b2, w3, b3 = kernel_params
    G, N, A = node_features.shape
    E = node_embeddings.shape[-1]
    c_pad = w3.shape[1]

    def resident(arr):
        # Full-array block, same block index every grid step -> stays
        # VMEM-resident (weights are DMA'd once, never re-fetched).
        return pl.BlockSpec(arr.shape, lambda g, _nd=arr.ndim: (0,) * _nd)

    out = pl.pallas_call(
        readout_kernel,
        out_shape=jax.ShapeDtypeStruct((G, 1, c_pad), jnp.float32),
        grid=(G,),
        in_specs=[
            pl.BlockSpec((1, N, A), lambda g: (g, 0, 0)),
            pl.BlockSpec((1, N, E), lambda g: (g, 0, 0)),
            resident(w1a), resident(w1b), resident(b1),
            resident(w2), resident(b2), resident(w3), resident(b3),
        ],
        out_specs=pl.BlockSpec((1, 1, c_pad), lambda g: (g, 0, 0)),
        compiler_params=pltpu.CompilerParams(
            dimension_semantics=("parallel",)),
    )(node_features, node_embeddings, w1a, w1b, b1, w2, b2, w3, b3)
    return out[:, 0, :num_cats]                                        # [G, C]


def readout_forward(node_features, node_embeddings, kernel_params, num_cats):
    """Single-graph API matching the PyTorch module:
    node_features: [N, attr_dim] f32, node_embeddings: [N, embedding_dim] f32."""
    out = readout_forward_batched(node_features[None], node_embeddings[None],
                                  kernel_params, num_cats)
    return out[0]                                                      # [num_cats]


def init_params(key, attr_dim, embedding_dim, hidden_dim, output_dim, num_cats):
    d_in = attr_dim + embedding_dim
    ks = jax.random.split(key, 6)

    def lin(kw, kb, fan_in, fan_out):
        # deterministic, PyTorch-Linear-like uniform init (stored as [in, out])
        bound = 1.0 / jnp.sqrt(fan_in)
        w = jax.random.uniform(kw, (fan_in, fan_out), jnp.float32, -bound, bound)
        b = jax.random.uniform(kb, (1, fan_out), jnp.float32, -bound, bound)
        return w, b

    w1, b1 = lin(ks[0], ks[1], d_in, hidden_dim)
    w2, b2 = lin(ks[2], ks[3], hidden_dim, output_dim)
    w3, b3 = lin(ks[4], ks[5], output_dim, num_cats)
    return (w1, b1, w2, b2, w3, b3)


def readout_ref(node_features, node_embeddings, params):
    """Pure-f32 reference matching the PyTorch module exactly (one graph)."""
    w1, b1, w2, b2, w3, b3 = params
    x = jnp.concatenate([node_features, node_embeddings], axis=1)
    h = jnp.maximum(x @ w1 + b1, 0.0)
    g = jnp.maximum(h @ w2 + b2, 0.0)
    return jnp.mean(g @ w3 + b3, axis=0)


def readout_ref_bf16(node_features, node_embeddings, kernel_params, num_cats):
    """Reference emulating the kernel's bf16 matmuls / mean hoist (tight check)."""
    w1a, w1b, b1, w2, b2, w3, b3 = kernel_params
    f = node_features.astype(jnp.bfloat16)
    e = node_embeddings.astype(jnp.bfloat16)
    h = jnp.maximum(
        jnp.dot(f, w1a, preferred_element_type=jnp.float32)
        + jnp.dot(e, w1b, preferred_element_type=jnp.float32) + b1, 0.0)
    g = jnp.maximum(
        jnp.dot(h.astype(jnp.bfloat16), w2, preferred_element_type=jnp.float32)
        + b2, 0.0)
    gm = jnp.mean(g, axis=0, keepdims=True)
    logits = jnp.dot(gm.astype(jnp.bfloat16), w3,
                     preferred_element_type=jnp.float32) + b3
    return logits[0, :num_cats]


if __name__ == "__main__":
    # small shapes consistent with the module
    N = 8              # nodes per molecule graph
    G = 3              # graphs for the batched path
    attr_dim = 16
    embedding_dim = 16
    hidden_dim = 32
    output_dim = 16
    num_cats = 4

    key = jax.random.PRNGKey(0)
    k_feat, k_emb, k_param = jax.random.split(key, 3)

    node_features = jax.random.normal(k_feat, (G, N, attr_dim), jnp.float32)
    node_embeddings = jax.random.normal(k_emb, (G, N, embedding_dim), jnp.float32)
    params = init_params(k_param, attr_dim, embedding_dim,
                         hidden_dim, output_dim, num_cats)
    kernel_params = prepare_params(params, attr_dim)

    # --- single-graph path (matches the PyTorch module API) ---
    logits = readout_forward(node_features[0], node_embeddings[0],
                             kernel_params, num_cats)
    jax.block_until_ready(logits)
    assert logits.shape == (num_cats,)

    ref_bf16 = readout_ref_bf16(node_features[0], node_embeddings[0],
                                kernel_params, num_cats)
    assert jnp.allclose(logits, ref_bf16, atol=1e-3, rtol=1e-3)
    ref_f32 = readout_ref(node_features[0], node_embeddings[0], params)
    assert jnp.allclose(logits, ref_f32, atol=5e-2, rtol=5e-2)

    # --- batched path (one graph per grid step, parallel axis) ---
    logits_b = readout_forward_batched(node_features, node_embeddings,
                                       kernel_params, num_cats)
    jax.block_until_ready(logits_b)
    assert logits_b.shape == (G, num_cats)
    for g in range(G):
        rb = readout_ref_bf16(node_features[g], node_embeddings[g],
                              kernel_params, num_cats)
        rf = readout_ref(node_features[g], node_embeddings[g], params)
        assert jnp.allclose(logits_b[g], rb, atol=1e-3, rtol=1e-3)
        assert jnp.allclose(logits_b[g], rf, atol=5e-2, rtol=5e-2)

    print("KERNEL_OK")
</pallas_src>

<mosaic_0001>
module attributes {stable_mosaic.version = 11 : i64} {
  func.func @readout_kernel(%arg0: i32, %arg1: memref<1x8x16xf32, #tpu.memory_space<vmem>>, %arg2: memref<1x8x16xf32, #tpu.memory_space<vmem>>, %arg3: memref<16x32xbf16, #tpu.memory_space<vmem>>, %arg4: memref<16x32xbf16, #tpu.memory_space<vmem>>, %arg5: memref<1x32xf32, #tpu.memory_space<vmem>>, %arg6: memref<32x16xbf16, #tpu.memory_space<vmem>>, %arg7: memref<1x16xf32, #tpu.memory_space<vmem>>, %arg8: memref<16x128xbf16, #tpu.memory_space<vmem>>, %arg9: memref<1x128xf32, #tpu.memory_space<vmem>>, %arg10: memref<1x1x128xf32, #tpu.memory_space<vmem>>) attributes {dimension_semantics = [#tpu.dimension_semantics<parallel>], iteration_bounds = array<i64: 1>, scalar_prefetch = 0 : i64, scratch_operands = 0 : i64, tpu.core_type = #tpu.core_type<tc>, window_params = [{transform_indices = @transform_0, window_bounds = array<i64: 1, 8, 16>}, {transform_indices = @transform_1, window_bounds = array<i64: 1, 8, 16>}, {pipeline_mode = #tpu.pipeline_mode<synchronous>, transform_indices = @transform_2, window_bounds = array<i64: 16, 32>}, {pipeline_mode = #tpu.pipeline_mode<synchronous>, transform_indices = @transform_3, window_bounds = array<i64: 16, 32>}, {pipeline_mode = #tpu.pipeline_mode<synchronous>, transform_indices = @transform_4, window_bounds = array<i64: 1, 32>}, {pipeline_mode = #tpu.pipeline_mode<synchronous>, transform_indices = @transform_5, window_bounds = array<i64: 32, 16>}, {pipeline_mode = #tpu.pipeline_mode<synchronous>, transform_indices = @transform_6, window_bounds = array<i64: 1, 16>}, {pipeline_mode = #tpu.pipeline_mode<synchronous>, transform_indices = @transform_7, window_bounds = array<i64: 16, 128>}, {pipeline_mode = #tpu.pipeline_mode<synchronous>, transform_indices = @transform_8, window_bounds = array<i64: 1, 128>}, {transform_indices = @transform_9, window_bounds = array<i64: 1, 1, 128>}]} {
    %c0 = arith.constant 0 : index
    %c0_0 = arith.constant 0 : index
    %c0_1 = arith.constant 0 : index
    %0 = vector.load %arg1[%c0, %c0_0, %c0_1] : memref<1x8x16xf32, #tpu.memory_space<vmem>>, vector<1x8x16xf32>
    %1 = vector.shape_cast %0 : vector<1x8x16xf32> to vector<8x16xf32>
    %2 = arith.truncf %1 : vector<8x16xf32> to vector<8x16xbf16>
    %c0_2 = arith.constant 0 : index
    %c0_3 = arith.constant 0 : index
    %c0_4 = arith.constant 0 : index
    %3 = vector.load %arg2[%c0_2, %c0_3, %c0_4] : memref<1x8x16xf32, #tpu.memory_space<vmem>>, vector<1x8x16xf32>
    %4 = vector.shape_cast %3 : vector<1x8x16xf32> to vector<8x16xf32>
    %5 = arith.truncf %4 : vector<8x16xf32> to vector<8x16xbf16>
    %c0_5 = arith.constant 0 : index
    %c0_6 = arith.constant 0 : index
    %6 = vector.load %arg3[%c0_5, %c0_6] : memref<16x32xbf16, #tpu.memory_space<vmem>>, vector<16x32xbf16>
    %cst = arith.constant dense<0.000000e+00> : vector<8x32xf32>
    %7 = tpu.matmul %2, %6, %cst {dimension_numbers = #tpu.dot_dimension_numbers<[1], [0], [0], [1], [0, 0, 1, 1], [], []>} : vector<8x16xbf16>, vector<16x32xbf16>, vector<8x32xf32> -> vector<8x32xf32>
    %c0_7 = arith.constant 0 : index
    %c0_8 = arith.constant 0 : index
    %8 = vector.load %arg4[%c0_7, %c0_8] : memref<16x32xbf16, #tpu.memory_space<vmem>>, vector<16x32xbf16>
    %cst_9 = arith.constant dense<0.000000e+00> : vector<8x32xf32>
    %9 = tpu.matmul %5, %8, %cst_9 {dimension_numbers = #tpu.dot_dimension_numbers<[1], [0], [0], [1], [0, 0, 1, 1], [], []>} : vector<8x16xbf16>, vector<16x32xbf16>, vector<8x32xf32> -> vector<8x32xf32>
    %10 = arith.addf %7, %9 : vector<8x32xf32>
    %c0_10 = arith.constant 0 : index
    %c0_11 = arith.constant 0 : index
    %11 = vector.load %arg5[%c0_10, %c0_11] : memref<1x32xf32, #tpu.memory_space<vmem>>, vector<1x32xf32>
    %12 = vector.broadcast %11 : vector<1x32xf32> to vector<8x32xf32>
    %13 = arith.addf %10, %12 : vector<8x32xf32>
    %cst_12 = arith.constant 0.000000e+00 : f32
    %14 = vector.broadcast %cst_12 : f32 to vector<8x32xf32>
    %15 = arith.maximumf %13, %14 : vector<8x32xf32>
    %16 = arith.truncf %15 : vector<8x32xf32> to vector<8x32xbf16>
    %c0_13 = arith.constant 0 : index
    %c0_14 = arith.constant 0 : index
    %17 = vector.load %arg6[%c0_13, %c0_14] : memref<32x16xbf16, #tpu.memory_space<vmem>>, vector<32x16xbf16>
    %cst_15 = arith.constant dense<0.000000e+00> : vector<8x16xf32>
    %18 = tpu.matmul %16, %17, %cst_15 {dimension_numbers = #tpu.dot_dimension_numbers<[1], [0], [0], [1], [0, 0, 1, 1], [], []>} : vector<8x32xbf16>, vector<32x16xbf16>, vector<8x16xf32> -> vector<8x16xf32>
    %c0_16 = arith.constant 0 : index
    %c0_17 = arith.constant 0 : index
    %19 = vector.load %arg7[%c0_16, %c0_17] : memref<1x16xf32, #tpu.memory_space<vmem>>, vector<1x16xf32>
    %20 = vector.broadcast %19 : vector<1x16xf32> to vector<8x16xf32>
    %21 = arith.addf %18, %20 : vector<8x16xf32>
    %cst_18 = arith.constant 0.000000e+00 : f32
    %22 = vector.broadcast %cst_18 : f32 to vector<8x16xf32>
    %23 = arith.maximumf %21, %22 : vector<8x16xf32>
    %cst_19 = arith.constant dense<0.000000e+00> : vector<16xf32>
    %24 = vector.multi_reduction <add>, %23, %cst_19 [0] : vector<8x16xf32> to vector<16xf32>
    %25 = vector.shape_cast %24 : vector<16xf32> to vector<1x16xf32>
    %cst_20 = arith.constant 8.000000e+00 : f32
    %26 = vector.broadcast %cst_20 : f32 to vector<1x16xf32>
    %27 = arith.divf %25, %26 : vector<1x16xf32>
    %28 = arith.truncf %27 : vector<1x16xf32> to vector<1x16xbf16>
    %c0_21 = arith.constant 0 : index
    %c0_22 = arith.constant 0 : index
    %29 = vector.load %arg8[%c0_21, %c0_22] : memref<16x128xbf16, #tpu.memory_space<vmem>>, vector<16x128xbf16>
    %cst_23 = arith.constant dense<0.000000e+00> : vector<1x128xf32>
    %30 = tpu.matmul %28, %29, %cst_23 {dimension_numbers = #tpu.dot_dimension_numbers<[1], [0], [0], [1], [0, 0, 1, 1], [], []>} : vector<1x16xbf16>, vector<16x128xbf16>, vector<1x128xf32> -> vector<1x128xf32>
    %c0_24 = arith.constant 0 : index
    %c0_25 = arith.constant 0 : index
    %31 = vector.load %arg9[%c0_24, %c0_25] : memref<1x128xf32, #tpu.memory_space<vmem>>, vector<1x128xf32>
    %32 = arith.addf %30, %31 : vector<1x128xf32>
    %c0_26 = arith.constant 0 : index
    %c0_27 = arith.constant 0 : index
    %c0_28 = arith.constant 0 : index
    %33 = vector.load %arg10[%c0_26, %c0_27, %c0_28] : memref<1x1x128xf32, #tpu.memory_space<vmem>>, vector<1x1x128xf32>
    %34 = vector.shape_cast %33 : vector<1x1x128xf32> to vector<1x128xf32>
    %35 = vector.shape_cast %32 : vector<1x128xf32> to vector<1x1x128xf32>
    tpu.vector_store %arg10[%c0_26, %c0_27, %c0_28], %35 {strides = array<i32>} : memref<1x1x128xf32, #tpu.memory_space<vmem>>, vector<1x1x128xf32>,
    return
  }
  func.func @transform_0(%arg0: i32) -> (i32, i32, i32) {
    %c0_i32 = arith.constant 0 : i32
    %c0_i32_0 = arith.constant 0 : i32
    %c0_i32_1 = arith.constant 0 : i32
    return %arg0, %c0_i32, %c0_i32_0 : i32, i32, i32
  }
  func.func @transform_1(%arg0: i32) -> (i32, i32, i32) {
    %c0_i32 = arith.constant 0 : i32
    %c0_i32_0 = arith.constant 0 : i32
    %c0_i32_1 = arith.constant 0 : i32
    return %arg0, %c0_i32, %c0_i32_0 : i32, i32, i32
  }
  func.func @transform_2(%arg0: i32) -> (i32, i32) {
    %c0_i32 = arith.constant 0 : i32
    %c0_i32_0 = arith.constant 0 : i32
    %c0_i32_1 = arith.constant 0 : i32
    return %c0_i32, %c0_i32_0 : i32, i32
  }
  func.func @transform_3(%arg0: i32) -> (i32, i32) {
    %c0_i32 = arith.constant 0 : i32
    %c0_i32_0 = arith.constant 0 : i32
    %c0_i32_1 = arith.constant 0 : i32
    return %c0_i32, %c0_i32_0 : i32, i32
  }
  func.func @transform_4(%arg0: i32) -> (i32, i32) {
    %c0_i32 = arith.constant 0 : i32
    %c0_i32_0 = arith.constant 0 : i32
    %c0_i32_1 = arith.constant 0 : i32
    return %c0_i32, %c0_i32_0 : i32, i32
  }
  func.func @transform_5(%arg0: i32) -> (i32, i32) {
    %c0_i32 = arith.constant 0 : i32
    %c0_i32_0 = arith.constant 0 : i32
    %c0_i32_1 = arith.constant 0 : i32
    return %c0_i32, %c0_i32_0 : i32, i32
  }
  func.func @transform_6(%arg0: i32) -> (i32, i32) {
    %c0_i32 = arith.constant 0 : i32
    %c0_i32_0 = arith.constant 0 : i32
    %c0_i32_1 = arith.constant 0 : i32
    return %c0_i32, %c0_i32_0 : i32, i32
  }
  func.func @transform_7(%arg0: i32) -> (i32, i32) {
    %c0_i32 = arith.constant 0 : i32
    %c0_i32_0 = arith.constant 0 : i32
    %c0_i32_1 = arith.constant 0 : i32
    return %c0_i32, %c0_i32_0 : i32, i32
  }
  func.func @transform_8(%arg0: i32) -> (i32, i32) {
    %c0_i32 = arith.constant 0 : i32
    %c0_i32_0 = arith.constant 0 : i32
    %c0_i32_1 = arith.constant 0 : i32
    return %c0_i32, %c0_i32_0 : i32, i32
  }
  func.func @transform_9(%arg0: i32) -> (i32, i32, i32) {
    %c0_i32 = arith.constant 0 : i32
    %c0_i32_0 = arith.constant 0 : i32
    %c0_i32_1 = arith.constant 0 : i32
    return %arg0, %c0_i32, %c0_i32_0 : i32, i32, i32
  }
}

</mosaic_0001>

<llo_original>
// kernel: tpu_custom_call.1
$region0: #{tpu_custom_call.1}
  #allocation0 [shape = 'u32[]', space=smem, size = 0x4, offset = 0x4, fixed_abs, tag = 'smem constant byte address 0x4 - core index']
  #allocation1 [shape = 'u32[144,128]{1,0:T(1,128)}', space=vmem, size = 0x12000, scoped, tag = 'internal scratch']
  %s0 = inlined_call_operand.vmem [shape: f32[1,8,16], index: 0, kind: input, shape index: {}]
  %s1 = inlined_call_operand.vmem [shape: f32[1,8,16], index: 1, kind: input, shape index: {}]
  %s2 = inlined_call_operand.vmem [shape: bf16[16,32], index: 2, kind: input, shape index: {}]
  %s3 = inlined_call_operand.hbm [shape: bf16[16,32], index: 3, kind: input, shape index: {}]
  %s4 = inlined_call_operand.vmem [shape: f32[1,32], index: 4, kind: input, shape index: {}]
  %s5 = inlined_call_operand.vmem [shape: bf16[32,16], index: 5, kind: input, shape index: {}]
  %s6 = inlined_call_operand.vmem [shape: f32[1,16], index: 6, kind: input, shape index: {}]
  %s7 = inlined_call_operand.vmem [shape: bf16[16,128], index: 7, kind: input, shape index: {}]
  %s8 = inlined_call_operand.vmem [shape: f32[1,128], index: 8, kind: input, shape index: {}]
  %s9 = inlined_call_operand.hbm [shape: f32[1,1,128], index: 9, kind: output, shape index: {}]
  %s10 = sld [smem:[#allocation0]]
  $region50: #{tpu_custom_call.1} parent=0
    _
  %s12 = ssub.s32 1, %s10
  %s13 = scalar_select 0, %s12, %s10
  $region1: #{tpu_custom_call.1} parent=0
    #allocation2 [shape = 'u8[4096]{0}', space=vmem, size = 0x1000, scoped, tag = 'input window, operand 3, single buffered']
    #allocation3 [shape = 's32[1]{0}', space=sflag, size = 0x4, scoped, tag = 'scoped memory for tpu_custom_call.1']
    #allocation4 [shape = 's32[1]{0}', space=sflag, size = 0x4, scoped, tag = 'scoped memory for tpu_custom_call.1']
    #allocation5 [shape = 'u8[512]{0}', space=vmem, size = 0x400, scoped, tag = 'output window, operand 0, single buffered']
    %14 = vsyncpa [#allocation3], 0
    %15 = vsyncpa [#allocation4], 0
    // Predicated region
    $region2: #{tpu_custom_call.1} parent=1 // pred_check
      _
    $region3: #{tpu_custom_call.1} parent=1 // pred_check_branch
      %17 = sbr.rel (0) target = $region5
    $region4: #{tpu_custom_call.1} parent=1 // pred_region
      _
    $region5: #{tpu_custom_call.1} parent=1 // pred_fallthru
      _
    // Predicated region
    $region6: #{tpu_custom_call.1} parent=1 // pred_check
      _
    $region7: #{tpu_custom_call.1} parent=1 // pred_check_branch
      %19 = sbr.rel (0) target = $region9
    $region8: #{tpu_custom_call.1} parent=1 // pred_region
      _
    $region9: #{tpu_custom_call.1} parent=1 // pred_fallthru
      _
    // Predicated region
    $region10: #{tpu_custom_call.1} parent=1 // pred_check
      _
    $region11: #{tpu_custom_call.1} parent=1 // pred_check_branch
      %21 = sbr.rel (0) target = $region13
    $region12: #{tpu_custom_call.1} parent=1 // pred_region
      _
    $region13: #{tpu_custom_call.1} parent=1 // pred_fallthru
      _
    // Predicated region
    $region14: #{tpu_custom_call.1} parent=1 // pred_check
      _
    $region15: #{tpu_custom_call.1} parent=1 // pred_check_branch
      %23 = sbr.rel (0) target = $region17
    $region16: #{tpu_custom_call.1} parent=1 // pred_region
      %s25 = ssub.s32 128, 128
      %26 = vsyncadd [#allocation3], %s25
      %s27 = sshll.u32 [#allocation2], 4
      %s28 = int_to_ptr.vmem [resolvable:$true] %s27
      %33 = dma.hbm_to_vmem [thread:$0]  %s3, 128, %s28, [#allocation3], 64, 64, 4
    $region17: #{tpu_custom_call.1} parent=1 // pred_fallthru
      _
    // Predicated region
    $region18: #{tpu_custom_call.1} parent=1 // pred_check
      _
    $region19: #{tpu_custom_call.1} parent=1 // pred_check_branch
      %35 = sbr.rel (0) target = $region21
    $region20: #{tpu_custom_call.1} parent=1 // pred_region
      _
    $region21: #{tpu_custom_call.1} parent=1 // pred_fallthru
      _
    // Predicated region
    $region22: #{tpu_custom_call.1} parent=1 // pred_check
      _
    $region23: #{tpu_custom_call.1} parent=1 // pred_check_branch
      %37 = sbr.rel (0) target = $region25
    $region24: #{tpu_custom_call.1} parent=1 // pred_region
      _
    $region25: #{tpu_custom_call.1} parent=1 // pred_fallthru
      _
    // Predicated region
    $region26: #{tpu_custom_call.1} parent=1 // pred_check
      _
    $region27: #{tpu_custom_call.1} parent=1 // pred_check_branch
      %39 = sbr.rel (0) target = $region29
    $region28: #{tpu_custom_call.1} parent=1 // pred_region
      _
    $region29: #{tpu_custom_call.1} parent=1 // pred_fallthru
      _
    // Predicated region
    $region30: #{tpu_custom_call.1} parent=1 // pred_check
      _
    $region31: #{tpu_custom_call.1} parent=1 // pred_check_branch
      %41 = sbr.rel (0) target = $region33
    $region32: #{tpu_custom_call.1} parent=1 // pred_region
      _
    $region33: #{tpu_custom_call.1} parent=1 // pred_fallthru
      _
    // Predicated region
    $region34: #{tpu_custom_call.1} parent=1 // pred_check
      _
    $region35: #{tpu_custom_call.1} parent=1 // pred_check_branch
      %43 = sbr.rel (0) target = $region37
    $region36: #{tpu_custom_call.1} parent=1 // pred_region
      _
    $region37: #{tpu_custom_call.1} parent=1 // pred_fallthru
      _
    // Predicated region
    $region38: #{tpu_custom_call.1} parent=1 // pred_check
      _
    $region39: #{tpu_custom_call.1} parent=1 // pred_check_branch
      %45 = sbr.rel (0) target = $region41
    $region40: #{tpu_custom_call.1} parent=1 // pred_region
      %46 = dma.done [#allocation3], 128
    $region41: #{tpu_custom_call.1} parent=1 // pred_fallthru
      _
    %v48 = vld [vmem:[%s0] sm:$0xff]
    %v49 = vpack.c.bf16 %v48, %v48
    %v50 = vld [vmem:[%s1] sm:$0xff]
    %v51 = vpack.c.bf16 %v50, %v50
    %v52 = vld [vmem:[%s2] sm:$0xf]
    %v53 = vld [vmem:[%s2 + $0x4] sm:$0xf]
    %v54 = vld [vmem:[#allocation2] sm:$0xf]
    %v55 = vld [vmem:[#allocation2 + $0x4] sm:$0xf]
    %v58 = vunpack.c.l.b16 %v54
    %v59 = vunpack.c.l.b16 %v55
    %v60 = vpack.c.b16 %v59, %v58
    %vm62 = vcmask 130048
    %v64 = vsel %vm62, %v51, 0
    %66 = vmatprep.subr.bf16.mxu0 0
    %67 = vmatpush1.bf16.msra.mxu0 %v60
    %68 = vmatprep.subr.bf16.mxu0 0
    %69 = vmatpush1.bf16.msra.mxu0 0
    %70 = vmatprep.subr.bf16.mxu0 0
    %71 = vmatpush1.bf16.msra.mxu0 0
    %72 = vmatprep.subr.bf16.mxu0 0
    %73 = vmatpush1.bf16.msra.mxu0 0
    %74 = vmatprep.subr.bf16.mxu0 0
    %75 = vmatpush1.bf16.msra.mxu0 0
    %76 = vmatprep.subr.bf16.mxu0 0
    %77 = vmatpush1.bf16.msra.mxu0 0
    %78 = vmatprep.subr.bf16.mxu0 0
    %79 = vmatpush1.bf16.msra.mxu0 0
    %80 = vmatprep.subr.bf16.mxu0 0
    %81 = vmatpush1.bf16.msra.mxu0 0
    %82 = vmatprep.subr.bf16.mxu0 0
    %83 = vmatpush1.bf16.msra.mxu0 0
    %84 = vmatprep.subr.bf16.mxu0 0
    %85 = vmatpush1.bf16.msra.mxu0 0
    %86 = vmatprep.subr.bf16.mxu0 0
    %87 = vmatpush1.bf16.msra.mxu0 0
    %88 = vmatprep.subr.bf16.mxu0 0
    %89 = vmatpush1.bf16.msra.mxu0 0
    %90 = vmatprep.subr.bf16.mxu0 0
    %91 = vmatpush1.bf16.msra.mxu0 0
    %92 = vmatprep.subr.bf16.mxu0 0
    %93 = vmatpush1.bf16.msra.mxu0 0
    %94 = vmatprep.subr.bf16.mxu0 0
    %95 = vmatpush1.bf16.msra.mxu0 0
    %96 = vmatprep.subr.bf16.mxu0 0
    %97 = vmatpush1.bf16.msra.mxu0 0
    %98 = vmatprep.mubr.bf16.mxu0 0
    %99 = vmatmul.mubr.bf16.gmra.mrb[0].mxu0 %v64
    %v100 = vpop.f32.mrb[0].mxu0
    %v101 = vadd.f32 0.0, %v100
    %v102 = vpop.f32.mrb[0].mxu0
    %v103 = vpop.f32.mrb[0].mxu0
    %v104 = vpop.f32.mrb[0].mxu0
    %105 = vdwg.mxu0
    %v108 = vunpack.c.l.b16 %v52
    %v109 = vunpack.c.l.b16 %v53
    %v110 = vpack.c.b16 %v109, %v108
    %v113 = vsel %vm62, %v49, 0
    %115 = vmatprep.subr.bf16.mxu0 0
    %116 = vmatpush1.bf16.msra.mxu0 %v110
    %117 = vmatprep.subr.bf16.mxu0 0
    %118 = vmatpush1.bf16.msra.mxu0 0
    %119 = vmatprep.subr.bf16.mxu0 0
    %120 = vmatpush1.bf16.msra.mxu0 0
    %121 = vmatprep.subr.bf16.mxu0 0
    %122 = vmatpush1.bf16.msra.mxu0 0
    %123 = vmatprep.subr.bf16.mxu0 0
    %124 = vmatpush1.bf16.msra.mxu0 0
    %125 = vmatprep.subr.bf16.mxu0 0
    %126 = vmatpush1.bf16.msra.mxu0 0
    %127 = vmatprep.subr.bf16.mxu0 0
    %128 = vmatpush1.bf16.msra.mxu0 0
    %129 = vmatprep.subr.bf16.mxu0 0
    %130 = vmatpush1.bf16.msra.mxu0 0
    %131 = vmatprep.subr.bf16.mxu0 0
    %132 = vmatpush1.bf16.msra.mxu0 0
    %133 = vmatprep.subr.bf16.mxu0 0
    %134 = vmatpush1.bf16.msra.mxu0 0
    %135 = vmatprep.subr.bf16.mxu0 0
    %136 = vmatpush1.bf16.msra.mxu0 0
    %137 = vmatprep.subr.bf16.mxu0 0
    %138 = vmatpush1.bf16.msra.mxu0 0
    %139 = vmatprep.subr.bf16.mxu0 0
    %140 = vmatpush1.bf16.msra.mxu0 0
    %141 = vmatprep.subr.bf16.mxu0 0
    %142 = vmatpush1.bf16.msra.mxu0 0
    %143 = vmatprep.subr.bf16.mxu0 0
    %144 = vmatpush1.bf16.msra.mxu0 0
    %145 = vmatprep.subr.bf16.mxu0 0
    %146 = vmatpush1.bf16.msra.mxu0 0
    %147 = vmatprep.mubr.bf16.mxu0 0
    %148 = vmatmul.mubr.bf16.gmra.mrb[0].mxu0 %v113
    %v149 = vpop.f32.mrb[0].mxu0
    %v150 = vadd.f32 %v101, %v149
    %v151 = vpop.f32.mrb[0].mxu0
    %v152 = vpop.f32.mrb[0].mxu0
    %v153 = vpop.f32.mrb[0].mxu0
    %154 = vdwg.mxu0
    %v155 = vld [vmem:[%s4] sm:$0x1]
    %v157 = vlaneseq
    %v158 = vshrl.u32 %v157, 7
    %v159 = vsub.s32 0, %v158
    %v160 = vrot.slane %v155, %v159
    %v162 = vadd.f32 %v150, %v160
    %v163 = vmax.f32 %v162, 0.0
    %v164 = vpack.c.bf16 %v163, %v163
    %v165 = vld [vmem:[%s5] sm:$0xf]
    %v166 = vld [vmem:[%s5 + $0x4] sm:$0xf]
    %v167 = vld [vmem:[%s5 + $0x8] sm:$0xf]
    %v168 = vld [vmem:[%s5 + $0xc] sm:$0xf]
    %v169 = vld [vmem:[%s6] sm:$0x1]
    %v171 = vlaneseq
    %v172 = vshrl.u32 %v171, 7
    %v173 = vsub.s32 0, %v172
    %v174 = vrot.slane %v169, %v173
    %v180 = vunpack.c.l.b16 %v165
    %v181 = vunpack.c.l.b16 %v166
    %v182 = vunpack.c.l.b16 %v167
    %v183 = vunpack.c.l.b16 %v168
    %v184 = vpack.c.b16 %v181, %v180
    %v185 = vpack.c.b16 %v183, %v182
    %vm188 = vcmask 261120
    %v190 = vsel %vm188, %v164, 0
    %192 = vmatprep.subr.bf16.mxu0 0
    %193 = vmatpush1.bf16.msra.mxu0 %v184
    %194 = vmatprep.subr.bf16.mxu0 0
    %195 = vmatpush1.bf16.msra.mxu0 %v185
    %196 = vmatprep.subr.bf16.mxu0 0
    %197 = vmatpush1.bf16.msra.mxu0 0
    %198 = vmatprep.subr.bf16.mxu0 0
    %199 = vmatpush1.bf16.msra.mxu0 0
    %200 = vmatprep.subr.bf16.mxu0 0
    %201 = vmatpush1.bf16.msra.mxu0 0
    %202 = vmatprep.subr.bf16.mxu0 0
    %203 = vmatpush1.bf16.msra.mxu0 0
    %204 = vmatprep.subr.bf16.mxu0 0
    %205 = vmatpush1.bf16.msra.mxu0 0
    %206 = vmatprep.subr.bf16.mxu0 0
    %207 = vmatpush1.bf16.msra.mxu0 0
    %208 = vmatprep.subr.bf16.mxu0 0
    %209 = vmatpush1.bf16.msra.mxu0 0
    %210 = vmatprep.subr.bf16.mxu0 0
    %211 = vmatpush1.bf16.msra.mxu0 0
    %212 = vmatprep.subr.bf16.mxu0 0
    %213 = vmatpush1.bf16.msra.mxu0 0
    %214 = vmatprep.subr.bf16.mxu0 0
    %215 = vmatpush1.bf16.msra.mxu0 0
    %216 = vmatprep.subr.bf16.mxu0 0
    %217 = vmatpush1.bf16.msra.mxu0 0
    %218 = vmatprep.subr.bf16.mxu0 0
    %219 = vmatpush1.bf16.msra.mxu0 0
    %220 = vmatprep.subr.bf16.mxu0 0
    %221 = vmatpush1.bf16.msra.mxu0 0
    %222 = vmatprep.subr.bf16.mxu0 0
    %223 = vmatpush1.bf16.msra.mxu0 0
    %224 = vmatprep.mubr.bf16.mxu0 0
    %225 = vmatmul.mubr.bf16.gmra.mrb[0].mxu0 %v190
    %v226 = vpop.f32.mrb[0].mxu0
    %v227 = vadd.f32 %v174, %v226
    %v228 = vpop.f32.mrb[0].mxu0
    %v229 = vpop.f32.mrb[0].mxu0
    %v230 = vpop.f32.mrb[0].mxu0
    %231 = vdwg.mxu0
    %v232 = vmax.f32 %v227, 0.0
    %v233 = vsel %vm62, %v232, 0.0
    %v234 = vrot.slane %v233, 4
    %v235 = vadd.f32 %v233, %v234
    %v236 = vrot.slane %v235, 2
    %v237 = vadd.f32 %v235, %v236
    %v238 = vrot.slane %v237, 1
    %v239 = vadd.f32 %v237, %v238
    %v240 = vrcp.pop 8.0
    %v241 = vmul.f32 %v239, %v240
    %v242 = vpack.c.bf16 %v241, %v241
    %v243 = vld [vmem:[%s7] sm:$0xf]
    %v244 = vld [vmem:[%s7 + $0x4] sm:$0xf]
    %v245 = vld [vmem:[%s8] sm:$0x1]
    %v248 = vunpack.c.l.b16 %v243
    %v249 = vunpack.c.l.b16 %v244
    %v250 = vpack.c.b16 %v249, %v248
    %v253 = vsel %vm62, %v242, 0
    %255 = vmatprep.subr.bf16.mxu0 0
    %256 = vmatpush1.bf16.msra.mxu0 %v250
    %257 = vmatprep.subr.bf16.mxu0 0
    %258 = vmatpush1.bf16.msra.mxu0 0
    %259 = vmatprep.subr.bf16.mxu0 0
    %260 = vmatpush1.bf16.msra.mxu0 0
    %261 = vmatprep.subr.bf16.mxu0 0
    %262 = vmatpush1.bf16.msra.mxu0 0
    %263 = vmatprep.subr.bf16.mxu0 0
    %264 = vmatpush1.bf16.msra.mxu0 0
    %265 = vmatprep.subr.bf16.mxu0 0
    %266 = vmatpush1.bf16.msra.mxu0 0
    %267 = vmatprep.subr.bf16.mxu0 0
    %268 = vmatpush1.bf16.msra.mxu0 0
    %269 = vmatprep.subr.bf16.mxu0 0
    %270 = vmatpush1.bf16.msra.mxu0 0
    %271 = vmatprep.subr.bf16.mxu0 0
    %272 = vmatpush1.bf16.msra.mxu0 0
    %273 = vmatprep.subr.bf16.mxu0 0
    %274 = vmatpush1.bf16.msra.mxu0 0
    %275 = vmatprep.subr.bf16.mxu0 0
    %276 = vmatpush1.bf16.msra.mxu0 0
    %277 = vmatprep.subr.bf16.mxu0 0
    %278 = vmatpush1.bf16.msra.mxu0 0
    %279 = vmatprep.subr.bf16.mxu0 0
    %280 = vmatpush1.bf16.msra.mxu0 0
    %281 = vmatprep.subr.bf16.mxu0 0
    %282 = vmatpush1.bf16.msra.mxu0 0
    %283 = vmatprep.subr.bf16.mxu0 0
    %284 = vmatpush1.bf16.msra.mxu0 0
    %285 = vmatprep.subr.bf16.mxu0 0
    %286 = vmatpush1.bf16.msra.mxu0 0
    %287 = vmatprep.mubr.bf16.mxu0 0
    %288 = vmatmul.mubr.bf16.gmra.mrb[0].mxu0 %v253
    %v289 = vpop.f32.mrb[0].mxu0
    %v290 = vadd.f32 %v245, %v289
    %v291 = vpop.f32.mrb[0].mxu0
    %v292 = vpop.f32.mrb[0].mxu0
    %v293 = vpop.f32.mrb[0].mxu0
    %294 = vdwg.mxu0
    %295 = vst [vmem:[#allocation5] sm:$0x1] %v290
    // Predicated region
    $region42: #{tpu_custom_call.1} parent=1 // pred_check
      _
    $region43: #{tpu_custom_call.1} parent=1 // pred_check_branch
      %297 = sbr.rel (0) target = $region45
    $region44: #{tpu_custom_call.1} parent=1 // pred_region
      %s299 = ssub.s32 16, 16
      %300 = vsyncadd [#allocation4], %s299
      %s302 = sshll.u32 [#allocation5], 4
      %s303 = int_to_ptr.vmem [resolvable:$true] %s302
      %305 = dma.vmem_to_hbm [thread:$0]  %s303, 16, %s9, [#allocation4]
    $region45: #{tpu_custom_call.1} parent=1 // pred_fallthru
      _
    // Predicated region
    $region46: #{tpu_custom_call.1} parent=1 // pred_check
      _
    $region47: #{tpu_custom_call.1} parent=1 // pred_check_branch
      %307 = sbr.rel (0) target = $region49
    $region48: #{tpu_custom_call.1} parent=1 // pred_region
      %308 = dma.done [#allocation4], 16
    $region49: #{tpu_custom_call.1} parent=1 // pred_fallthru
      _
    %309 = vsyncpa [#allocation3], 1
    %310 = vsyncpa [#allocation4], 1

</llo_original>
